<compile_context>
chip_gen: v7x
topology: tpu7x:2x2x1
jax: 0.10.0
libtpu: 0.0.40
codegen_flags: <defaults>
</compile_context>

<pallas_src>
import functools

import numpy as np
import jax
import jax.numpy as jnp
from jax import lax
from jax.experimental import pallas as pl
from jax.experimental.pallas import tpu as pltpu

# Module "parameters" (from __init__), fixed deterministically in-script.
N_HOLES = 2
LENGTH = 6

LANE = 128
_MAX_BLOCK_BYTES = 2 << 20      # per-step input block budget (x4 for double-buffered in+out)
_MAX_GROUP = 64                 # bound on the static per-block image unroll


def cutout_kernel(holes_ref, img_ref, out_ref, *, H, W, n_holes):
    """One group of G images per grid step.

    holes_ref: SMEM int32[B*4*n_holes] flat = [y1, y2, x1, x2] per hole.
    img_ref / out_ref: VMEM (G, P, 128) lane-dense flat view of G (C,H,W) images.
    """
    b = pl.program_id(0)
    G, P, L = img_ref.shape

    # (c, h) index of every element of the lane-dense (P, 128) view.
    # Image-independent -> computed once per block, reused for all G images.
    p_iota = lax.broadcasted_iota(jnp.int32, (P, L), 0)
    l_iota = lax.broadcasted_iota(jnp.int32, (P, L), 1)
    if W & (W - 1) == 0:                        # power-of-two width: shifts only
        w_shift = W.bit_length() - 1
        if L % W == 0:
            ch = p_iota * (L // W) + (l_iota >> w_shift)
        else:
            ch = (p_iota * L + l_iota) >> w_shift
    else:
        ch = (p_iota * L + l_iota) // W         # flat // W
    if H & (H - 1) == 0:
        h_shift = H.bit_length() - 1
        c_idx = ch >> h_shift
        h_idx = ch & (H - 1)
    else:
        c_idx = ch // H
        h_idx = ch % H

    for g in range(G):                          # static unroll; G is small (capped)
        img = img_ref[g]
        if n_holes == 0:
            out_ref[g] = img
            continue
        base = (b * G + g) * (4 * n_holes)
        inside_any = None
        for n in range(n_holes):
            y1 = holes_ref[base + 4 * n + 0]
            y2 = holes_ref[base + 4 * n + 1]
            x1 = holes_ref[base + 4 * n + 2]
            x2 = holes_ref[base + 4 * n + 3]
            # Unsigned range check: (v - lo) u< (hi - lo)  <=>  lo <= v < hi.
            # mask[y1:y2, x1:x2] = 0 on a (C,H,W) mask -> first dim = channel,
            # second dim = height (reproduces the module's behaviour exactly).
            dy = (y2 - y1).astype(jnp.uint32)
            dx = (x2 - x1).astype(jnp.uint32)
            inside = (((c_idx - y1).astype(jnp.uint32) < dy)
                      & ((h_idx - x1).astype(jnp.uint32) < dx))
            inside_any = inside if inside_any is None else (inside_any | inside)
        out_ref[g] = jnp.where(inside_any, jnp.zeros((), img.dtype), img)


def _choose_group(batch, img_bytes):
    """Largest divisor of `batch` whose block fits the budget, keeping >=2 steps."""
    divisors = [d for d in range(1, batch + 1) if batch % d == 0]
    fitting = [d for d in divisors
               if d <= _MAX_GROUP and d * img_bytes <= _MAX_BLOCK_BYTES]
    if not fitting:
        return 1
    multi = [d for d in fitting if batch // d >= 2]   # pipeline / v7x megacore
    return max(multi) if multi else max(fitting)


@jax.jit
def cutout_pallas(imgs, holes):
    """imgs: (B, C, H, W); holes: flat int32[B*4*N_HOLES] = [y1,y2,x1,x2] per hole."""
    B, C, H, W = imgs.shape
    itemsize = np.dtype(imgs.dtype).itemsize
    total = C * H * W

    # Lane-dense flat view (P, 128) per image, padded so stores are full-width
    # vst and the row count matches the dtype sublane tile (8 f32 / 16 bf16 / 32 i8).
    sub = max(8, 32 // itemsize)
    P_pad = ((pl.cdiv(total, LANE) + sub - 1) // sub) * sub
    padded_total = P_pad * LANE
    img_bytes = padded_total * itemsize

    G = _choose_group(B, img_bytes)
    grid = (B // G,)
    block_bytes = G * img_bytes

    x = imgs.reshape(B, total)
    if padded_total != total:
        x = jnp.pad(x, ((0, 0), (0, padded_total - total)))
    x = x.reshape(B, P_pad, LANE)

    kernel = functools.partial(cutout_kernel, H=H, W=W, n_holes=N_HOLES)

    compiler_kwargs = dict(dimension_semantics=("parallel",))
    vmem_need = 4 * block_bytes          # 2 pipeline buffers x (input + output)
    if vmem_need > (12 << 20):           # only when above conservative scoped defaults
        compiler_kwargs["vmem_limit_bytes"] = min(
            int(vmem_need * 1.5) + (1 << 20), 64 << 20)

    out_flat = pl.pallas_call(
        kernel,
        out_shape=jax.ShapeDtypeStruct((B, P_pad, LANE), imgs.dtype),
        grid_spec=pltpu.PrefetchScalarGridSpec(
            num_scalar_prefetch=1,                       # holes table -> SMEM (flat 1D)
            grid=grid,
            in_specs=[pl.BlockSpec((G, P_pad, LANE), lambda b, holes: (b, 0, 0))],
            out_specs=pl.BlockSpec((G, P_pad, LANE), lambda b, holes: (b, 0, 0)),
        ),
        compiler_params=pltpu.CompilerParams(**compiler_kwargs),
        input_output_aliases={1: 0},                     # mask in place (imgs_flat -> out)
        cost_estimate=pl.CostEstimate(
            flops=0, transcendentals=0,
            bytes_accessed=2 * B * padded_total * itemsize),
    )(holes, x)

    out = out_flat.reshape(B, padded_total)
    if padded_total != total:
        out = out[:, :total]
    return out.reshape(B, C, H, W)


def sample_holes_np(rng, batch, c, h, w, n_holes, length):
    """Host-side deterministic replacement for the module's np.random.randint."""
    holes = np.zeros((batch, 4 * n_holes), np.int32)
    for i in range(batch):
        for n in range(n_holes):
            y = rng.randint(h)
            x = rng.randint(w)
            y1 = int(np.clip(y - length // 2, 0, h))
            y2 = int(np.clip(y + length // 2, 0, h))
            x1 = int(np.clip(x - length // 2, 0, w))
            x2 = int(np.clip(x + length // 2, 0, w))
            holes[i, 4 * n: 4 * n + 4] = [y1, y2, x1, x2]
    return holes


def reference_cutout(imgs_np, holes_np, n_holes):
    """Direct numpy port of the PyTorch module's forward (per image)."""
    out = np.empty_like(imgs_np)
    B, C, H, W = imgs_np.shape
    for i in range(B):
        mask = np.ones((C, H, W), np.float32)
        for n in range(n_holes):
            y1, y2, x1, x2 = holes_np[i, 4 * n: 4 * n + 4]
            mask[y1:y2, x1:x2] = 0.0
        out[i] = imgs_np[i] * mask
    return out


if __name__ == "__main__":
    rng = np.random.RandomState(0)
    key = jax.random.PRNGKey(0)
    k1, k2 = jax.random.split(key)

    # Test 1: C*H*W multiple of 128, power-of-two H/W (shift path).
    B, C, H, W = 2, 4, 16, 16
    imgs = jax.random.normal(k1, (B, C, H, W), dtype=jnp.float32)
    holes_np = sample_holes_np(rng, B, C, H, W, N_HOLES, LENGTH)
    imgs_np = np.asarray(imgs)  # snapshot before the (aliased) kernel runs
    out = jax.block_until_ready(cutout_pallas(imgs, jnp.asarray(holes_np.reshape(-1))))
    ref = reference_cutout(imgs_np, holes_np, N_HOLES)
    np.testing.assert_allclose(np.asarray(out), ref, rtol=1e-6, atol=1e-6)

    # Test 2: non-power-of-two H/W and C*H*W not a multiple of 128 (padding path).
    B2, C2, H2, W2 = 3, 3, 7, 5
    imgs2 = jax.random.normal(k2, (B2, C2, H2, W2), dtype=jnp.float32)
    holes2_np = sample_holes_np(rng, B2, C2, H2, W2, N_HOLES, LENGTH)
    imgs2_np = np.asarray(imgs2)
    out2 = jax.block_until_ready(cutout_pallas(imgs2, jnp.asarray(holes2_np.reshape(-1))))
    ref2 = reference_cutout(imgs2_np, holes2_np, N_HOLES)
    np.testing.assert_allclose(np.asarray(out2), ref2, rtol=1e-6, atol=1e-6)

    print("KERNEL_OK")
</pallas_src>

<mosaic_0001>
module attributes {stable_mosaic.version = 11 : i64} {
  func.func @cutout_kernel(%arg0: i32, %arg1: memref<16xi32, #tpu.memory_space<smem>>, %arg2: memref<1x8x128xf32, #tpu.memory_space<vmem>>, %arg3: memref<1x8x128xf32, #tpu.memory_space<vmem>>) attributes {dimension_semantics = [#tpu.dimension_semantics<parallel>], iteration_bounds = array<i64: 2>, scalar_prefetch = 1 : i64, scratch_operands = 0 : i64, tpu.core_type = #tpu.core_type<tc>, window_params = [{transform_indices = @transform_0, window_bounds = array<i64: 1, 8, 128>}, {transform_indices = @transform_1, window_bounds = array<i64: 1, 8, 128>}]} {
    %0 = tpu.iota {dimensions = array<i32: 0>} : vector<8x128xi32>
    %1 = tpu.iota {dimensions = array<i32: 1>} : vector<8x128xi32>
    %c8_i32 = arith.constant 8 : i32
    %2 = vector.broadcast %c8_i32 : i32 to vector<8x128xi32>
    %3 = arith.muli %0, %2 : vector<8x128xi32>
    %c4_i32 = arith.constant 4 : i32
    %4 = vector.broadcast %c4_i32 : i32 to vector<8x128xi32>
    %5 = arith.shrsi %1, %4 : vector<8x128xi32>
    %6 = arith.addi %3, %5 : vector<8x128xi32>
    %c4_i32_0 = arith.constant 4 : i32
    %7 = vector.broadcast %c4_i32_0 : i32 to vector<8x128xi32>
    %8 = arith.shrsi %6, %7 : vector<8x128xi32>
    %c15_i32 = arith.constant 15 : i32
    %9 = vector.broadcast %c15_i32 : i32 to vector<8x128xi32>
    %10 = arith.andi %6, %9 : vector<8x128xi32>
    %c0 = arith.constant 0 : index
    %c0_1 = arith.constant 0 : index
    %c0_2 = arith.constant 0 : index
    %11 = vector.load %arg2[%c0, %c0_1, %c0_2] : memref<1x8x128xf32, #tpu.memory_space<vmem>>, vector<1x8x128xf32>
    %12 = vector.shape_cast %11 : vector<1x8x128xf32> to vector<8x128xf32>
    %c1_i32 = arith.constant 1 : i32
    %13 = arith.muli %arg0, %c1_i32 : i32
    %c0_i32 = arith.constant 0 : i32
    %14 = arith.addi %13, %c0_i32 : i32
    %c8_i32_3 = arith.constant 8 : i32
    %15 = arith.muli %14, %c8_i32_3 : i32
    %c0_i32_4 = arith.constant 0 : i32
    %16 = arith.addi %15, %c0_i32_4 : i32
    %c0_i32_5 = arith.constant 0 : i32
    %17 = arith.addi %16, %c0_i32_5 : i32
    %18 = arith.index_cast %17 : i32 to index
    %19 = memref.load %arg1[%18] : memref<16xi32, #tpu.memory_space<smem>>
    %c0_i32_6 = arith.constant 0 : i32
    %20 = arith.addi %15, %c0_i32_6 : i32
    %c1_i32_7 = arith.constant 1 : i32
    %21 = arith.addi %20, %c1_i32_7 : i32
    %22 = arith.index_cast %21 : i32 to index
    %23 = memref.load %arg1[%22] : memref<16xi32, #tpu.memory_space<smem>>
    %c0_i32_8 = arith.constant 0 : i32
    %24 = arith.addi %15, %c0_i32_8 : i32
    %c2_i32 = arith.constant 2 : i32
    %25 = arith.addi %24, %c2_i32 : i32
    %26 = arith.index_cast %25 : i32 to index
    %27 = memref.load %arg1[%26] : memref<16xi32, #tpu.memory_space<smem>>
    %c0_i32_9 = arith.constant 0 : i32
    %28 = arith.addi %15, %c0_i32_9 : i32
    %c3_i32 = arith.constant 3 : i32
    %29 = arith.addi %28, %c3_i32 : i32
    %30 = arith.index_cast %29 : i32 to index
    %31 = memref.load %arg1[%30] : memref<16xi32, #tpu.memory_space<smem>>
    %32 = arith.subi %23, %19 : i32
    %33 = arith.subi %31, %27 : i32
    %34 = vector.broadcast %19 : i32 to vector<8x128xi32>
    %35 = arith.subi %8, %34 : vector<8x128xi32>
    %36 = vector.broadcast %32 : i32 to vector<8x128xi32>
    %37 = arith.cmpi ult, %35, %36 : vector<8x128xi32>
    %38 = vector.broadcast %27 : i32 to vector<8x128xi32>
    %39 = arith.subi %10, %38 : vector<8x128xi32>
    %40 = vector.broadcast %33 : i32 to vector<8x128xi32>
    %41 = arith.cmpi ult, %39, %40 : vector<8x128xi32>
    %42 = arith.andi %37, %41 : vector<8x128xi1>
    %c4_i32_10 = arith.constant 4 : i32
    %43 = arith.addi %15, %c4_i32_10 : i32
    %c0_i32_11 = arith.constant 0 : i32
    %44 = arith.addi %43, %c0_i32_11 : i32
    %45 = arith.index_cast %44 : i32 to index
    %46 = memref.load %arg1[%45] : memref<16xi32, #tpu.memory_space<smem>>
    %c4_i32_12 = arith.constant 4 : i32
    %47 = arith.addi %15, %c4_i32_12 : i32
    %c1_i32_13 = arith.constant 1 : i32
    %48 = arith.addi %47, %c1_i32_13 : i32
    %49 = arith.index_cast %48 : i32 to index
    %50 = memref.load %arg1[%49] : memref<16xi32, #tpu.memory_space<smem>>
    %c4_i32_14 = arith.constant 4 : i32
    %51 = arith.addi %15, %c4_i32_14 : i32
    %c2_i32_15 = arith.constant 2 : i32
    %52 = arith.addi %51, %c2_i32_15 : i32
    %53 = arith.index_cast %52 : i32 to index
    %54 = memref.load %arg1[%53] : memref<16xi32, #tpu.memory_space<smem>>
    %c4_i32_16 = arith.constant 4 : i32
    %55 = arith.addi %15, %c4_i32_16 : i32
    %c3_i32_17 = arith.constant 3 : i32
    %56 = arith.addi %55, %c3_i32_17 : i32
    %57 = arith.index_cast %56 : i32 to index
    %58 = memref.load %arg1[%57] : memref<16xi32, #tpu.memory_space<smem>>
    %59 = arith.subi %50, %46 : i32
    %60 = arith.subi %58, %54 : i32
    %61 = vector.broadcast %46 : i32 to vector<8x128xi32>
    %62 = arith.subi %8, %61 : vector<8x128xi32>
    %63 = vector.broadcast %59 : i32 to vector<8x128xi32>
    %64 = arith.cmpi ult, %62, %63 : vector<8x128xi32>
    %65 = vector.broadcast %54 : i32 to vector<8x128xi32>
    %66 = arith.subi %10, %65 : vector<8x128xi32>
    %67 = vector.broadcast %60 : i32 to vector<8x128xi32>
    %68 = arith.cmpi ult, %66, %67 : vector<8x128xi32>
    %69 = arith.andi %64, %68 : vector<8x128xi1>
    %70 = arith.ori %42, %69 : vector<8x128xi1>
    %cst = arith.constant 0.000000e+00 : f32
    %71 = vector.broadcast %cst : f32 to vector<8x128xf32>
    %72 = arith.select %70, %71, %12 : vector<8x128xi1>, vector<8x128xf32>
    %c0_18 = arith.constant 0 : index
    %c0_19 = arith.constant 0 : index
    %c0_20 = arith.constant 0 : index
    %73 = vector.load %arg3[%c0_18, %c0_19, %c0_20] : memref<1x8x128xf32, #tpu.memory_space<vmem>>, vector<1x8x128xf32>
    %74 = vector.shape_cast %73 : vector<1x8x128xf32> to vector<8x128xf32>
    %75 = vector.shape_cast %72 : vector<8x128xf32> to vector<1x8x128xf32>
    tpu.vector_store %arg3[%c0_18, %c0_19, %c0_20], %75 {strides = array<i32>} : memref<1x8x128xf32, #tpu.memory_space<vmem>>, vector<1x8x128xf32>,
    return
  }
  func.func @transform_0(%arg0: i32, %arg1: memref<16xi32, #tpu.memory_space<smem>>) -> (i32, i32, i32) {
    %c0_i32 = arith.constant 0 : i32
    %c0_i32_0 = arith.constant 0 : i32
    %c0_i32_1 = arith.constant 0 : i32
    return %arg0, %c0_i32, %c0_i32_0 : i32, i32, i32
  }
  func.func @transform_1(%arg0: i32, %arg1: memref<16xi32, #tpu.memory_space<smem>>) -> (i32, i32, i32) {
    %c0_i32 = arith.constant 0 : i32
    %c0_i32_0 = arith.constant 0 : i32
    %c0_i32_1 = arith.constant 0 : i32
    return %arg0, %c0_i32, %c0_i32_0 : i32, i32, i32
  }
}

</mosaic_0001>

<llo_original>
// kernel: cutout_pallas.1
$region0: #{cutout_pallas.1}
  #allocation0 [shape = 'u32[]', space=smem, size = 0x4, offset = 0x4, fixed_abs, tag = 'smem constant byte address 0x4 - core index']
  #allocation1 [shape = 'u32[144,128]{1,0:T(1,128)}', space=vmem, size = 0x12000, scoped, tag = 'internal scratch']
  #allocation2 [shape = 's32[1]{0}', space=sflag, size = 0x4, scoped, tag = 'scoped memory for cutout_pallas.1']
  #allocation3 [shape = 'u8[512]{0}', space=smem, size = 0x200, scoped, tag = 'prefetched SMEM operand 0']
  %s0 = inlined_call_operand.vmem [shape: s32[16], index: 0, kind: input, shape index: {}]
  %s1 = inlined_call_operand.vmem [shape: f32[2,8,128], index: 1, kind: input, shape index: {}, may-alias: {1,2}]
  %s2 = inlined_call_operand.vmem [shape: f32[2,8,128], index: 2, kind: output, shape index: {}, may-alias: {1,2}]
  %s3 = sld [smem:[#allocation0]]
  $region37: #{cutout_pallas.1} parent=0
    _
  %s5 = ssub.s32 1, %s3
  %s6 = scalar_select 0, %s5, %s3
  %s7 = sshll.u32 %s0, 4
  %s8 = int_to_ptr.vmem [resolvable:$true] %s7
  %10 = dma.vmem_to_smem %s8, 16, [#allocation3], [#allocation2]
  %11 = dma.done [#allocation2], 16
  %12 = sfence
  loop: start=0, step=1, limit=4
  $region2: #{cutout_pallas.1} parent=0 // loop_pre_header
    _
  $region3: #{cutout_pallas.1} parent=0 // loop_header
    %s14 = sphi 0, %s18
    %p15 = scmp.ge.s32.totalorder %s14, 4
    %s24 = sphi 0, %s26
    %s27 = sphi 0, %s24
    %s28 = sphi 0, %s27
    %s44 = sphi 0, %s28
    %s50 = sphi 0, %s52
    %s53 = sphi 0, %s50
    %s54 = sphi 0, %s53
    %s70 = sphi 0, %s54
  $region4: #{cutout_pallas.1} parent=0 // loop_header_branch
    %17 = sbr.rel (%p15) target = $region8
  $region5: #{cutout_pallas.1} parent=0 // loop_body
    %s19 = ssub.s32 %s14, 1
    %s20 = ssub.s32 %s14, 2
    %s21 = sadd.s32 %s14, 1
    %s22 = ssub.s32 %s14, %s21
    %p23 = scmp.eq.s32.totalorder %s22, 0
    %s25 = sadd.s32 %s24, 1
    %s26 = scalar_select %p23, %s24, %s25
    %p29 = pneg %p23
    %p30 = scmp.eq.s32.totalorder %s14, 1
    %p31 = por %p29, %p30
    %p32 = scmp.ne.s32.totalorder %s24, %s27
    %p33 = scmp.eq.s32.totalorder %s14, 0
    %p34 = por %p32, %p33
    %p35 = scmp.ne.s32.totalorder %s24, %s27
    %p36 = scmp.eq.s32.totalorder %s19, 1
    %p37 = por %p35, %p36
    %p38 = scmp.ne.s32.totalorder %s27, %s28
    %p39 = scmp.eq.s32.totalorder %s19, 0
    %p40 = por %p38, %p39
    %p41 = scmp.ne.s32.totalorder %s27, %s28
    %p42 = scmp.eq.s32.totalorder %s20, 1
    %p43 = por %p41, %p42
    %p45 = scmp.ne.s32.totalorder %s28, %s44
    %p46 = scmp.eq.s32.totalorder %s20, 0
    %p47 = por %p45, %p46
    %s48 = ssub.s32 %s14, %s21
    %p49 = scmp.eq.s32.totalorder %s48, 0
    %s51 = sadd.s32 %s50, 1
    %s52 = scalar_select %p49, %s50, %s51
    %p55 = pneg %p49
    %p56 = scmp.eq.s32.totalorder %s14, 1
    %p57 = por %p55, %p56
    %p58 = scmp.ne.s32.totalorder %s50, %s53
    %p59 = scmp.eq.s32.totalorder %s14, 0
    %p60 = por %p58, %p59
    %p61 = scmp.ne.s32.totalorder %s50, %s53
    %p62 = scmp.eq.s32.totalorder %s19, 1
    %p63 = por %p61, %p62
    %p64 = scmp.ne.s32.totalorder %s53, %s54
    %p65 = scmp.eq.s32.totalorder %s19, 0
    %p66 = por %p64, %p65
    %p67 = scmp.ne.s32.totalorder %s53, %s54
    %p68 = scmp.eq.s32.totalorder %s20, 1
    %p69 = por %p67, %p68
    %p71 = scmp.ne.s32.totalorder %s54, %s70
    %p72 = scmp.eq.s32.totalorder %s20, 0
    %p73 = por %p71, %p72
    %p74 = scmp.le.s32.totalorder 1, %s14
    %p75 = scmp.lt.s32.totalorder %s14, 3
    %p76 = pnand %p74, %p75
    %p77 = pneg %p76
    // Predicated region
    $region9: #{cutout_pallas.1} parent=5 // pred_check
      _
    $region10: #{cutout_pallas.1} parent=5 // pred_check_branch
      %79 = sbr.rel (%p76) target = $region12
    $region11: #{cutout_pallas.1} parent=5 // pred_region
      %s80 = ssub.s32 %s14, 1
    $region12: #{cutout_pallas.1} parent=5 // pred_fallthru
      _
    %p81 = scmp.lt.s32.totalorder %s14, 2
    // Predicated region
    $region13: #{cutout_pallas.1} parent=5 // pred_check
      %p82 = pneg %p81
    $region14: #{cutout_pallas.1} parent=5 // pred_check_branch
      %84 = sbr.rel (%p82) target = $region16
    $region15: #{cutout_pallas.1} parent=5 // pred_region
      // Predicated region
      $region17: #{cutout_pallas.1} parent=15 // pred_check
        %p85 = pneg %p34
      $region18: #{cutout_pallas.1} parent=15 // pred_check_branch
        %87 = sbr.rel (%p85) target = $region20
      $region19: #{cutout_pallas.1} parent=15 // pred_region
        %p88 = scmp.lt.s32.totalorder %s14, 1
        %s89 = scalar_select %p88, %s14, 1
        %s90 = smul.addr %s89, 8
        %s91 = scalar_lea.vmem %s1, %s90
      $region20: #{cutout_pallas.1} parent=15 // pred_fallthru
        _
    $region16: #{cutout_pallas.1} parent=5 // pred_fallthru
      _
    %p92 = scmp.le.s32.totalorder 1, %s14
    %p93 = scmp.lt.s32.totalorder %s14, 3
    %p94 = pnand %p92, %p93
    %p95 = pneg %p94
    // Predicated region
    $region21: #{cutout_pallas.1} parent=5 // pred_check
      _
    $region22: #{cutout_pallas.1} parent=5 // pred_check_branch
      %97 = sbr.rel (%p94) target = $region24
    $region23: #{cutout_pallas.1} parent=5 // pred_region
      %s98 = ssub.s32 %s14, 1
      %p99 = scmp.lt.s32.totalorder %s19, 1
      %s100 = scalar_select %p99, %s19, 1
      %s101 = smul.addr %s100, 8
      %s102 = scalar_lea.vmem %s1, %s101
      %p103 = pneg %p40
      %p104 = pneg %p37
      %p105 = pneg %p66
      %p106 = pneg %p63
      %p107 = scmp.lt.s32.totalorder %s19, 1
      %s108 = scalar_select %p107, %s19, 1
      %s109 = smul.addr %s108, 8
      %s110 = scalar_lea.vmem %s2, %s109
      %p111 = scmp.lt.s32.totalorder %s19, 1
      %s112 = scalar_select %p111, %s19, 1
      %s113 = smul.addr %s112, 8
      %s114 = scalar_lea.vmem %s1, %s113
      %p115 = scmp.lt.s32.totalorder %s19, 1
      %s116 = scalar_select %p115, %s19, 1
      %s117 = smul.addr %s116, 8
      %s118 = scalar_lea.vmem %s2, %s117
      %v119 = vlaneseq
      %v120 = vshrl.u32 %v119, 7
      %v121 = vlaneseq
      %v122 = vand.u32 %v121, 127
      %v123 = vmul.u32 %v120, 8
      %v124 = vshra.s32 %v122, 4
      %v125 = vadd.s32 %v123, %v124
      %v126 = vshra.s32 %v125, 4
      %v127 = vand.u32 %v125, 15
      %v128 = vld [vmem:[%s114] sm:$0xff]
      %s129 = smul.u32 %s19, 8
      %s130 = sld [smem:[#allocation3 + %s129]]
      %s131 = sadd.s32 %s129, 1
      %s132 = sld [smem:[#allocation3 + %s131]]
      %s133 = sadd.s32 %s129, 2
      %s134 = sld [smem:[#allocation3 + %s133]]
      %s135 = sadd.s32 %s129, 3
      %s136 = sld [smem:[#allocation3 + %s135]]
      %s137 = ssub.s32 %s132, %s130
      %s138 = ssub.s32 %s136, %s134
      %v139 = vstv %s130
      %v140 = vsub.s32 %v126, %v139
      %v141 = vstv %s137
      %vm142 = vcmp.lt.u32.totalorder %v140, %v141
      %v143 = vstv %s134
      %v144 = vsub.s32 %v127, %v143
      %v145 = vstv %s138
      %vm146 = vcmp.lt.u32.totalorder %v144, %v145
      %vm147 = vmand %vm142, %vm146
      %s148 = sadd.s32 %s129, 4
      %s149 = sld [smem:[#allocation3 + %s148]]
      %s150 = sadd.s32 %s129, 5
      %s151 = sld [smem:[#allocation3 + %s150]]
      %s152 = sadd.s32 %s129, 6
      %s153 = sld [smem:[#allocation3 + %s152]]
      %s154 = sadd.s32 %s129, 7
      %s155 = sld [smem:[#allocation3 + %s154]]
      %s156 = ssub.s32 %s151, %s149
      %s157 = ssub.s32 %s155, %s153
      %v158 = vstv %s149
      %v159 = vsub.s32 %v126, %v158
      %v160 = vstv %s156
      %vm161 = vcmp.lt.u32.totalorder %v159, %v160
      %v162 = vstv %s153
      %v163 = vsub.s32 %v127, %v162
      %v164 = vstv %s157
      %vm165 = vcmp.lt.u32.totalorder %v163, %v164
      %vm166 = vmand %vm161, %vm165
      %vm167 = vmor %vm147, %vm166
      %v168 = vsel %vm167, 0.0, %v128
      %169 = vst [vmem:[%s118] sm:$0xff] %v168
      %p170 = scmp.lt.s32.totalorder %s19, 1
      %s171 = scalar_select %p170, %s19, 1
      %s172 = smul.addr %s171, 8
      %s173 = scalar_lea.vmem %s2, %s172
      // Predicated region
      $region25: #{cutout_pallas.1} parent=23 // pred_check
        %p174 = pneg %p63
      $region26: #{cutout_pallas.1} parent=23 // pred_check_branch
        %176 = sbr.rel (%p174) target = $region28
      $region27: #{cutout_pallas.1} parent=23 // pred_region
        _
      $region28: #{cutout_pallas.1} parent=23 // pred_fallthru
        _
    $region24: #{cutout_pallas.1} parent=5 // pred_fallthru
      _
    %p177 = scmp.le.s32.totalorder 2, %s14
    // Predicated region
    $region29: #{cutout_pallas.1} parent=5 // pred_check
      %p178 = pneg %p177
    $region30: #{cutout_pallas.1} parent=5 // pred_check_branch
      %180 = sbr.rel (%p178) target = $region32
    $region31: #{cutout_pallas.1} parent=5 // pred_region
      %s181 = ssub.s32 %s14, 2
      // Predicated region
      $region33: #{cutout_pallas.1} parent=31 // pred_check
        %p182 = pneg %p69
      $region34: #{cutout_pallas.1} parent=31 // pred_check_branch
        %184 = sbr.rel (%p182) target = $region36
      $region35: #{cutout_pallas.1} parent=31 // pred_region
        %p185 = scmp.lt.s32.totalorder %s20, 1
        %s186 = scalar_select %p185, %s20, 1
        %s187 = smul.addr %s186, 8
        %s188 = scalar_lea.vmem %s2, %s187
      $region36: #{cutout_pallas.1} parent=31 // pred_fallthru
        _
    $region32: #{cutout_pallas.1} parent=5 // pred_fallthru
      _
  $region6: #{cutout_pallas.1} parent=0 // loop_footer
    %s18 = sadd.s32 1, %s14
  $region7: #{cutout_pallas.1} parent=0 // loop_footer_branch
    %13 = sbr.rel target = $region3
  $region8: #{cutout_pallas.1} parent=0 // loop_exit
    _

</llo_original>
